<compile_context>
chip_gen: v7x
topology: tpu7x:2x2x1
jax: 0.10.0
libtpu: 0.0.40
codegen_flags: <defaults>
</compile_context>

<pallas_src>
import math

import jax
import jax.numpy as jnp
from jax.experimental import pallas as pl
from jax.experimental.pallas import tpu as pltpu

_SUBLANE = 8     # vreg sublane width (second-to-last dim alignment)


def _round_up(x, m):
    return ((x + m - 1) // m) * m


def _mlp_kernel(x_ref, w1_ref, b1_ref, w2_ref, b2_ref, o_ref):
    # fc1: Linear + Tanh. Cast the activation tile to the weight dtype so bf16
    # weights feed the MXU natively; accumulation stays f32 either way.
    x = x_ref[...].astype(w1_ref.dtype)
    h = jnp.tanh(
        jnp.dot(x, w1_ref[...], preferred_element_type=jnp.float32) + b1_ref[...]
    )
    # fc2: Linear (bias add rides in free VPU slots under the MXU).
    o = (
        jnp.dot(h.astype(w2_ref.dtype), w2_ref[...],
                preferred_element_type=jnp.float32)
        + b2_ref[...]
    )
    # Unpadded (tm, n_out) store: masked vst, but output HBM traffic is exact.
    o_ref[...] = o.astype(o_ref.dtype)


def prepare_params(w1, b1, w2, b2, *, use_bf16_matmul=False):
    """One-time parameter prep (hoisted out of the forward hot path).

    use_bf16_matmul: store weights bf16 and feed the MXU bf16 operands with
    f32 accumulation (recommended on v5e; expect ~1e-2 rel tolerance vs f32).
    Biases stay f32 in either case.
    """
    w_dtype = jnp.bfloat16 if use_bf16_matmul else w1.dtype
    return (
        jnp.asarray(w1).astype(w_dtype),
        jnp.asarray(b1).reshape(1, -1).astype(jnp.float32),
        jnp.asarray(w2).astype(w_dtype),
        jnp.asarray(b2).reshape(1, -1).astype(jnp.float32),
    )


def _choose_tile(B, block_m, min_steps=2):
    """Batch tile: as large as block_m allows, but keep >=min_steps grid steps
    when the batch permits (dual-TC sharding on v7x + DMA/compute overlap)."""
    tm = min(block_m, _round_up(B, _SUBLANE))
    if B > _SUBLANE * min_steps and pl.cdiv(B, tm) < min_steps:
        tm = max(_SUBLANE, _round_up(pl.cdiv(B, min_steps), _SUBLANE))
    return tm


def nn_model_forward(x, params, *, block_m=4096, out_dtype=None):
    """Forward pass of NN_Model.

    x:      (B, n_in)
    params: (w1, b1, w2, b2) from prepare_params()
            w1: (n_in, n_hidden)  b1: (1, n_hidden)
            w2: (n_hidden, n_out) b2: (1, n_out)
    returns (B, n_out)

    block_m: batch-tile rows per grid step. At n_in=32, n_out=16 an f32
    4096-row tile is ~0.5 MiB x + ~0.25 MiB out (double-buffered) plus ~0.5 MiB
    of hidden scratch -- far under the scoped-VMEM default on v5e/v6e/v7x.
    """
    w1, b1, w2, b2 = params
    B, n_in = x.shape
    n_hidden = w1.shape[1]
    n_out = w2.shape[1]
    assert w1.shape[0] == n_in and w2.shape[0] == n_hidden
    out_dtype = x.dtype if out_dtype is None else out_dtype

    tm = _choose_tile(B, block_m)
    grid = (pl.cdiv(B, tm),)   # partial last block is masked by Pallas

    # ---- Advisory cost estimate (real, unpadded traffic).
    flops = 2 * B * (n_in * n_hidden + n_hidden * n_out)
    transcendentals = B * n_hidden  # tanh
    bytes_accessed = int(
        x.size * x.dtype.itemsize
        + sum(int(a.size) * a.dtype.itemsize for a in (w1, b1, w2, b2))
        + B * n_out * jnp.dtype(out_dtype).itemsize
    )

    vmem = pltpu.MemorySpace.VMEM
    return pl.pallas_call(
        _mlp_kernel,
        out_shape=jax.ShapeDtypeStruct((B, n_out), out_dtype),
        grid=grid,
        in_specs=[
            # x streams per batch tile (double-buffered by the pipeline).
            pl.BlockSpec((tm, n_in), lambda i: (i, 0), memory_space=vmem),
            # Weights / biases: constant index_map -> fetched once, resident.
            # (pipeline_mode=pl.Buffered(1) would drop the redundant second
            #  buffer, but the few KiB saved aren't worth the lowering risk.)
            pl.BlockSpec((n_in, n_hidden), lambda i: (0, 0), memory_space=vmem),
            pl.BlockSpec((1, n_hidden), lambda i: (0, 0), memory_space=vmem),
            pl.BlockSpec((n_hidden, n_out), lambda i: (0, 0), memory_space=vmem),
            pl.BlockSpec((1, n_out), lambda i: (0, 0), memory_space=vmem),
        ],
        out_specs=pl.BlockSpec((tm, n_out), lambda i: (i, 0), memory_space=vmem),
        compiler_params=pltpu.CompilerParams(
            dimension_semantics=("parallel",),
        ),
        cost_estimate=pl.CostEstimate(
            flops=flops,
            transcendentals=transcendentals,
            bytes_accessed=bytes_accessed,
        ),
    )(x, w1, b1, w2, b2)


def xavier_uniform(key, fan_in, fan_out, dtype=jnp.float32):
    # matches torch.nn.init.xavier_uniform_ (gain=1.0)
    bound = math.sqrt(6.0 / (fan_in + fan_out))
    # stored as (in, out) so the kernel can do x @ W directly
    return jax.random.uniform(key, (fan_in, fan_out), dtype=dtype,
                              minval=-bound, maxval=bound)


def init_params(key, n_in, n_hidden, n_out, dtype=jnp.float32):
    k1, k2 = jax.random.split(key)
    w1 = xavier_uniform(k1, n_in, n_hidden, dtype)
    b1 = jnp.zeros((1, n_hidden), dtype)            # nn.init.constant_(bias, 0.0)
    w2 = xavier_uniform(k2, n_hidden, n_out, dtype)
    b2 = jnp.zeros((1, n_out), dtype)
    return w1, b1, w2, b2


if __name__ == "__main__":
    key = jax.random.PRNGKey(0)
    kx, kp, kx2 = jax.random.split(key, 3)

    # Module ctor: NN_Model(n_in, n_hidden, n_out) with n_in a shape tuple;
    # forward consumes (batch, n_in[1]) features.
    batch, n_in_feat, n_hidden, n_out = 8, 32, 32, 16

    x = jax.random.normal(kx, (batch, n_in_feat), jnp.float32)
    w1, b1, w2, b2 = init_params(kp, n_in_feat, n_hidden, n_out)
    params = prepare_params(w1, b1, w2, b2)          # one-time, outside hot path

    # Small-shape correctness check (single full grid step).
    out = nn_model_forward(x, params)
    jax.block_until_ready(out)
    ref = jnp.tanh(x @ w1 + b1) @ w2 + b2
    assert out.shape == (batch, n_out)
    assert jnp.allclose(out, ref, atol=1e-5, rtol=1e-5)

    # Ragged batch (300): default block_m gives 2 grid steps (152 + masked 148)
    # with no wrapper-side padding copy of x and an unpadded (B, 16) output.
    x_big = jax.random.normal(kx2, (300, n_in_feat), jnp.float32)
    out_big = nn_model_forward(x_big, params)
    jax.block_until_ready(out_big)
    ref_big = jnp.tanh(x_big @ w1 + b1) @ w2 + b2
    assert out_big.shape == (300, n_out)
    assert jnp.allclose(out_big, ref_big, atol=1e-5, rtol=1e-5)

    print("KERNEL_OK")
</pallas_src>

<mosaic_0001>
module attributes {stable_mosaic.version = 11 : i64} {
  func.func @_mlp_kernel(%arg0: i32, %arg1: memref<8x32xf32, #tpu.memory_space<vmem>>, %arg2: memref<32x32xf32, #tpu.memory_space<vmem>>, %arg3: memref<1x32xf32, #tpu.memory_space<vmem>>, %arg4: memref<32x16xf32, #tpu.memory_space<vmem>>, %arg5: memref<1x16xf32, #tpu.memory_space<vmem>>, %arg6: memref<8x16xf32, #tpu.memory_space<vmem>>) attributes {dimension_semantics = [#tpu.dimension_semantics<parallel>], iteration_bounds = array<i64: 1>, scalar_prefetch = 0 : i64, scratch_operands = 0 : i64, tpu.core_type = #tpu.core_type<tc>, window_params = [{transform_indices = @transform_0, window_bounds = array<i64: 8, 32>}, {pipeline_mode = #tpu.pipeline_mode<synchronous>, transform_indices = @transform_1, window_bounds = array<i64: 32, 32>}, {pipeline_mode = #tpu.pipeline_mode<synchronous>, transform_indices = @transform_2, window_bounds = array<i64: 1, 32>}, {pipeline_mode = #tpu.pipeline_mode<synchronous>, transform_indices = @transform_3, window_bounds = array<i64: 32, 16>}, {pipeline_mode = #tpu.pipeline_mode<synchronous>, transform_indices = @transform_4, window_bounds = array<i64: 1, 16>}, {transform_indices = @transform_5, window_bounds = array<i64: 8, 16>}]} {
    %c0 = arith.constant 0 : index
    %c0_0 = arith.constant 0 : index
    %0 = vector.load %arg1[%c0, %c0_0] : memref<8x32xf32, #tpu.memory_space<vmem>>, vector<8x32xf32>
    %c0_1 = arith.constant 0 : index
    %c0_2 = arith.constant 0 : index
    %1 = vector.load %arg2[%c0_1, %c0_2] : memref<32x32xf32, #tpu.memory_space<vmem>>, vector<32x32xf32>
    %cst = arith.constant dense<0.000000e+00> : vector<8x32xf32>
    %2 = tpu.matmul %0, %1, %cst {dimension_numbers = #tpu.dot_dimension_numbers<[1], [0], [0], [1], [0, 0, 1, 1], [], []>} : vector<8x32xf32>, vector<32x32xf32>, vector<8x32xf32> -> vector<8x32xf32>
    %c0_3 = arith.constant 0 : index
    %c0_4 = arith.constant 0 : index
    %3 = vector.load %arg3[%c0_3, %c0_4] : memref<1x32xf32, #tpu.memory_space<vmem>>, vector<1x32xf32>
    %4 = vector.broadcast %3 : vector<1x32xf32> to vector<8x32xf32>
    %5 = arith.addf %2, %4 : vector<8x32xf32>
    %6 = math.tanh %5 : vector<8x32xf32>
    %c0_5 = arith.constant 0 : index
    %c0_6 = arith.constant 0 : index
    %7 = vector.load %arg4[%c0_5, %c0_6] : memref<32x16xf32, #tpu.memory_space<vmem>>, vector<32x16xf32>
    %cst_7 = arith.constant dense<0.000000e+00> : vector<8x16xf32>
    %8 = tpu.matmul %6, %7, %cst_7 {dimension_numbers = #tpu.dot_dimension_numbers<[1], [0], [0], [1], [0, 0, 1, 1], [], []>} : vector<8x32xf32>, vector<32x16xf32>, vector<8x16xf32> -> vector<8x16xf32>
    %c0_8 = arith.constant 0 : index
    %c0_9 = arith.constant 0 : index
    %9 = vector.load %arg5[%c0_8, %c0_9] : memref<1x16xf32, #tpu.memory_space<vmem>>, vector<1x16xf32>
    %10 = vector.broadcast %9 : vector<1x16xf32> to vector<8x16xf32>
    %11 = arith.addf %8, %10 : vector<8x16xf32>
    %c0_10 = arith.constant 0 : index
    %c0_11 = arith.constant 0 : index
    %12 = vector.load %arg6[%c0_10, %c0_11] : memref<8x16xf32, #tpu.memory_space<vmem>>, vector<8x16xf32>
    tpu.vector_store %arg6[%c0_10, %c0_11], %11 {strides = array<i32>} : memref<8x16xf32, #tpu.memory_space<vmem>>, vector<8x16xf32>,
    return
  }
  func.func @transform_0(%arg0: i32) -> (i32, i32) {
    %c0_i32 = arith.constant 0 : i32
    %c0_i32_0 = arith.constant 0 : i32
    return %arg0, %c0_i32 : i32, i32
  }
  func.func @transform_1(%arg0: i32) -> (i32, i32) {
    %c0_i32 = arith.constant 0 : i32
    %c0_i32_0 = arith.constant 0 : i32
    %c0_i32_1 = arith.constant 0 : i32
    return %c0_i32, %c0_i32_0 : i32, i32
  }
  func.func @transform_2(%arg0: i32) -> (i32, i32) {
    %c0_i32 = arith.constant 0 : i32
    %c0_i32_0 = arith.constant 0 : i32
    %c0_i32_1 = arith.constant 0 : i32
    return %c0_i32, %c0_i32_0 : i32, i32
  }
  func.func @transform_3(%arg0: i32) -> (i32, i32) {
    %c0_i32 = arith.constant 0 : i32
    %c0_i32_0 = arith.constant 0 : i32
    %c0_i32_1 = arith.constant 0 : i32
    return %c0_i32, %c0_i32_0 : i32, i32
  }
  func.func @transform_4(%arg0: i32) -> (i32, i32) {
    %c0_i32 = arith.constant 0 : i32
    %c0_i32_0 = arith.constant 0 : i32
    %c0_i32_1 = arith.constant 0 : i32
    return %c0_i32, %c0_i32_0 : i32, i32
  }
  func.func @transform_5(%arg0: i32) -> (i32, i32) {
    %c0_i32 = arith.constant 0 : i32
    %c0_i32_0 = arith.constant 0 : i32
    return %arg0, %c0_i32 : i32, i32
  }
}

</mosaic_0001>

<llo_original>
// kernel: tpu_custom_call.1
$region0: #{tpu_custom_call.1}
  #allocation0 [shape = 'u32[]', space=smem, size = 0x4, offset = 0x4, fixed_abs, tag = 'smem constant byte address 0x4 - core index']
  #allocation1 [shape = 'u32[144,128]{1,0:T(1,128)}', space=vmem, size = 0x12000, scoped, tag = 'internal scratch']
  %s0 = inlined_call_operand.vmem [shape: f32[8,32], index: 0, kind: input, shape index: {}]
  %s1 = inlined_call_operand.vmem [shape: f32[32,32], index: 1, kind: input, shape index: {}]
  %s2 = inlined_call_operand.vmem [shape: f32[1,32], index: 2, kind: input, shape index: {}]
  %s3 = inlined_call_operand.vmem [shape: f32[32,16], index: 3, kind: input, shape index: {}]
  %s4 = inlined_call_operand.vmem [shape: f32[1,16], index: 4, kind: input, shape index: {}]
  %s5 = inlined_call_operand.hbm [shape: f32[8,16], index: 5, kind: output, shape index: {}]
  %s6 = sld [smem:[#allocation0]]
  $region30: #{tpu_custom_call.1} parent=0
    _
  %s8 = ssub.s32 1, %s6
  %s9 = scalar_select 0, %s8, %s6
  $region1: #{tpu_custom_call.1} parent=0
    #allocation2 [shape = 'u8[4096]{0}', space=vmem, size = 0x1000, scoped, tag = 'output window, operand 0, single buffered']
    #allocation3 [shape = 's32[1]{0}', space=sflag, size = 0x4, scoped, tag = 'scoped memory for tpu_custom_call.1']
    %10 = vsyncpa [#allocation3], 0
    // Predicated region
    $region2: #{tpu_custom_call.1} parent=1 // pred_check
      _
    $region3: #{tpu_custom_call.1} parent=1 // pred_check_branch
      %12 = sbr.rel (0) target = $region5
    $region4: #{tpu_custom_call.1} parent=1 // pred_region
      _
    $region5: #{tpu_custom_call.1} parent=1 // pred_fallthru
      _
    // Predicated region
    $region6: #{tpu_custom_call.1} parent=1 // pred_check
      _
    $region7: #{tpu_custom_call.1} parent=1 // pred_check_branch
      %14 = sbr.rel (0) target = $region9
    $region8: #{tpu_custom_call.1} parent=1 // pred_region
      _
    $region9: #{tpu_custom_call.1} parent=1 // pred_fallthru
      _
    // Predicated region
    $region10: #{tpu_custom_call.1} parent=1 // pred_check
      _
    $region11: #{tpu_custom_call.1} parent=1 // pred_check_branch
      %16 = sbr.rel (0) target = $region13
    $region12: #{tpu_custom_call.1} parent=1 // pred_region
      _
    $region13: #{tpu_custom_call.1} parent=1 // pred_fallthru
      _
    // Predicated region
    $region14: #{tpu_custom_call.1} parent=1 // pred_check
      _
    $region15: #{tpu_custom_call.1} parent=1 // pred_check_branch
      %18 = sbr.rel (0) target = $region17
    $region16: #{tpu_custom_call.1} parent=1 // pred_region
      _
    $region17: #{tpu_custom_call.1} parent=1 // pred_fallthru
      _
    // Predicated region
    $region18: #{tpu_custom_call.1} parent=1 // pred_check
      _
    $region19: #{tpu_custom_call.1} parent=1 // pred_check_branch
      %20 = sbr.rel (0) target = $region21
    $region20: #{tpu_custom_call.1} parent=1 // pred_region
      _
    $region21: #{tpu_custom_call.1} parent=1 // pred_fallthru
      _
    %v21 = vld [vmem:[%s0] sm:$0xff]
    %v22 = vld [vmem:[%s1] sm:$0xff]
    %v23 = vld [vmem:[%s1 + $0x8] sm:$0xff]
    %v24 = vld [vmem:[%s1 + $0x10] sm:$0xff]
    %v25 = vld [vmem:[%s1 + $0x18] sm:$0xff]
    %v26 = vld [vmem:[%s2] sm:$0x1]
    %v28 = vlaneseq
    %v29 = vshrl.u32 %v28, 7
    %v30 = vsub.s32 0, %v29
    %v31 = vrot.slane %v26, %v30
    %vm33 = vcmask 261120
    %v35 = vsel %vm33, %v21, 0
    %37 = vmatprep.subr.mxu0 0.0
    %38 = vmatpush1.msra.mxu0 %v22
    %39 = vmatprep.subr.mxu0 0.0
    %40 = vmatpush1.msra.mxu0 %v23
    %41 = vmatprep.subr.mxu0 0.0
    %42 = vmatpush1.msra.mxu0 %v24
    %43 = vmatprep.subr.mxu0 0.0
    %44 = vmatpush1.msra.mxu0 %v25
    %45 = vmatprep.subr.mxu0 0.0
    %46 = vmatpush1.msra.mxu0 0.0
    %47 = vmatprep.subr.mxu0 0.0
    %48 = vmatpush1.msra.mxu0 0.0
    %49 = vmatprep.subr.mxu0 0.0
    %50 = vmatpush1.msra.mxu0 0.0
    %51 = vmatprep.subr.mxu0 0.0
    %52 = vmatpush1.msra.mxu0 0.0
    %53 = vmatprep.subr.mxu0 0.0
    %54 = vmatpush1.msra.mxu0 0.0
    %55 = vmatprep.subr.mxu0 0.0
    %56 = vmatpush1.msra.mxu0 0.0
    %57 = vmatprep.subr.mxu0 0.0
    %58 = vmatpush1.msra.mxu0 0.0
    %59 = vmatprep.subr.mxu0 0.0
    %60 = vmatpush1.msra.mxu0 0.0
    %61 = vmatprep.subr.mxu0 0.0
    %62 = vmatpush1.msra.mxu0 0.0
    %63 = vmatprep.subr.mxu0 0.0
    %64 = vmatpush1.msra.mxu0 0.0
    %65 = vmatprep.subr.mxu0 0.0
    %66 = vmatpush1.msra.mxu0 0.0
    %67 = vmatprep.subr.mxu0 0.0
    %68 = vmatpush1.msra.mxu0 0.0
    %69 = vmatprep.subr.mxu0 0.0
    %70 = vmatpush1.msra.mxu0 0.0
    %71 = vmatprep.subr.mxu0 0.0
    %72 = vmatpush1.msra.mxu0 0.0
    %73 = vmatprep.subr.mxu0 0.0
    %74 = vmatpush1.msra.mxu0 0.0
    %75 = vmatprep.subr.mxu0 0.0
    %76 = vmatpush1.msra.mxu0 0.0
    %77 = vmatprep.subr.mxu0 0.0
    %78 = vmatpush1.msra.mxu0 0.0
    %79 = vmatprep.subr.mxu0 0.0
    %80 = vmatpush1.msra.mxu0 0.0
    %81 = vmatprep.subr.mxu0 0.0
    %82 = vmatpush1.msra.mxu0 0.0
    %83 = vmatprep.subr.mxu0 0.0
    %84 = vmatpush1.msra.mxu0 0.0
    %85 = vmatprep.subr.mxu0 0.0
    %86 = vmatpush1.msra.mxu0 0.0
    %87 = vmatprep.subr.mxu0 0.0
    %88 = vmatpush1.msra.mxu0 0.0
    %89 = vmatprep.subr.mxu0 0.0
    %90 = vmatpush1.msra.mxu0 0.0
    %91 = vmatprep.subr.mxu0 0.0
    %92 = vmatpush1.msra.mxu0 0.0
    %93 = vmatprep.subr.mxu0 0.0
    %94 = vmatpush1.msra.mxu0 0.0
    %95 = vmatprep.subr.mxu0 0.0
    %96 = vmatpush1.msra.mxu0 0.0
    %97 = vmatprep.subr.mxu0 0.0
    %98 = vmatpush1.msra.mxu0 0.0
    %99 = vmatprep.subr.mxu0 0.0
    %100 = vmatpush1.msra.mxu0 0.0
    %101 = vmatprep.mubr.f32.mxu0 0.0
    %102 = vmatmul.mubr.f32.gmra.mrb[0].mxu0 %v35
    %v103 = vpop.f32.mrb[0].mxu0
    %v104 = vadd.f32 %v31, %v103
    %v105 = vpop.f32.mrb[0].mxu0
    %106 = vdwg.mxu0
    %v107 = vtanh.pop %v104
    %v108 = vld [vmem:[%s3] sm:$0xff]
    %v109 = vld [vmem:[%s3 + $0x8] sm:$0xff]
    %v110 = vld [vmem:[%s3 + $0x10] sm:$0xff]
    %v111 = vld [vmem:[%s3 + $0x18] sm:$0xff]
    %v112 = vld [vmem:[%s4] sm:$0x1]
    %v114 = vlaneseq
    %v115 = vshrl.u32 %v114, 7
    %v116 = vsub.s32 0, %v115
    %v117 = vrot.slane %v112, %v116
    %v120 = vsel %vm33, %v107, 0
    %122 = vmatprep.subr.mxu0 0.0
    %123 = vmatpush1.msra.mxu0 %v108
    %124 = vmatprep.subr.mxu0 0.0
    %125 = vmatpush1.msra.mxu0 %v109
    %126 = vmatprep.subr.mxu0 0.0
    %127 = vmatpush1.msra.mxu0 %v110
    %128 = vmatprep.subr.mxu0 0.0
    %129 = vmatpush1.msra.mxu0 %v111
    %130 = vmatprep.subr.mxu0 0.0
    %131 = vmatpush1.msra.mxu0 0.0
    %132 = vmatprep.subr.mxu0 0.0
    %133 = vmatpush1.msra.mxu0 0.0
    %134 = vmatprep.subr.mxu0 0.0
    %135 = vmatpush1.msra.mxu0 0.0
    %136 = vmatprep.subr.mxu0 0.0
    %137 = vmatpush1.msra.mxu0 0.0
    %138 = vmatprep.subr.mxu0 0.0
    %139 = vmatpush1.msra.mxu0 0.0
    %140 = vmatprep.subr.mxu0 0.0
    %141 = vmatpush1.msra.mxu0 0.0
    %142 = vmatprep.subr.mxu0 0.0
    %143 = vmatpush1.msra.mxu0 0.0
    %144 = vmatprep.subr.mxu0 0.0
    %145 = vmatpush1.msra.mxu0 0.0
    %146 = vmatprep.subr.mxu0 0.0
    %147 = vmatpush1.msra.mxu0 0.0
    %148 = vmatprep.subr.mxu0 0.0
    %149 = vmatpush1.msra.mxu0 0.0
    %150 = vmatprep.subr.mxu0 0.0
    %151 = vmatpush1.msra.mxu0 0.0
    %152 = vmatprep.subr.mxu0 0.0
    %153 = vmatpush1.msra.mxu0 0.0
    %154 = vmatprep.subr.mxu0 0.0
    %155 = vmatpush1.msra.mxu0 0.0
    %156 = vmatprep.subr.mxu0 0.0
    %157 = vmatpush1.msra.mxu0 0.0
    %158 = vmatprep.subr.mxu0 0.0
    %159 = vmatpush1.msra.mxu0 0.0
    %160 = vmatprep.subr.mxu0 0.0
    %161 = vmatpush1.msra.mxu0 0.0
    %162 = vmatprep.subr.mxu0 0.0
    %163 = vmatpush1.msra.mxu0 0.0
    %164 = vmatprep.subr.mxu0 0.0
    %165 = vmatpush1.msra.mxu0 0.0
    %166 = vmatprep.subr.mxu0 0.0
    %167 = vmatpush1.msra.mxu0 0.0
    %168 = vmatprep.subr.mxu0 0.0
    %169 = vmatpush1.msra.mxu0 0.0
    %170 = vmatprep.subr.mxu0 0.0
    %171 = vmatpush1.msra.mxu0 0.0
    %172 = vmatprep.subr.mxu0 0.0
    %173 = vmatpush1.msra.mxu0 0.0
    %174 = vmatprep.subr.mxu0 0.0
    %175 = vmatpush1.msra.mxu0 0.0
    %176 = vmatprep.subr.mxu0 0.0
    %177 = vmatpush1.msra.mxu0 0.0
    %178 = vmatprep.subr.mxu0 0.0
    %179 = vmatpush1.msra.mxu0 0.0
    %180 = vmatprep.subr.mxu0 0.0
    %181 = vmatpush1.msra.mxu0 0.0
    %182 = vmatprep.subr.mxu0 0.0
    %183 = vmatpush1.msra.mxu0 0.0
    %184 = vmatprep.subr.mxu0 0.0
    %185 = vmatpush1.msra.mxu0 0.0
    %186 = vmatprep.mubr.f32.mxu0 0.0
    %187 = vmatmul.mubr.f32.gmra.mrb[0].mxu0 %v120
    %v188 = vpop.f32.mrb[0].mxu0
    %v189 = vadd.f32 %v117, %v188
    %v190 = vpop.f32.mrb[0].mxu0
    %191 = vdwg.mxu0
    %vm192 = vcmask 130048
    %193 = vst.msk [vmem:[#allocation2] sm:$0xff] %vm192, %v189
    // Predicated region
    $region22: #{tpu_custom_call.1} parent=1 // pred_check
      _
    $region23: #{tpu_custom_call.1} parent=1 // pred_check_branch
      %195 = sbr.rel (0) target = $region25
    $region24: #{tpu_custom_call.1} parent=1 // pred_region
      %s197 = ssub.s32 128, 128
      %198 = vsyncadd [#allocation3], %s197
      %s200 = sshll.u32 [#allocation2], 4
      %s201 = int_to_ptr.vmem [resolvable:$true] %s200
      %203 = dma.vmem_to_hbm [thread:$0]  %s201, 128, %s5, [#allocation3]
    $region25: #{tpu_custom_call.1} parent=1 // pred_fallthru
      _
    // Predicated region
    $region26: #{tpu_custom_call.1} parent=1 // pred_check
      _
    $region27: #{tpu_custom_call.1} parent=1 // pred_check_branch
      %205 = sbr.rel (0) target = $region29
    $region28: #{tpu_custom_call.1} parent=1 // pred_region
      %206 = dma.done [#allocation3], 128
    $region29: #{tpu_custom_call.1} parent=1 // pred_fallthru
      _
    %207 = vsyncpa [#allocation3], 1

</llo_original>
